<compile_context>
chip_gen: v7x
topology: tpu7x:2x2x1
jax: 0.10.0
libtpu: 0.0.40
codegen_flags: <defaults>
</compile_context>

<pallas_src>
import math
import functools

import jax
import jax.numpy as jnp
from jax.experimental import pallas as pl
from jax.experimental.pallas import tpu as pltpu


def latlong_kernel(x_ref, w1_ref, b1_ref, w2_ref, b2_ref, w3_ref, b3_ref, o_ref):
    # x_ref:  (3, TB)   activations, batch on lanes
    # wN_ref: (out, in) PyTorch layout;  bN_ref: (out, 1)
    xT = x_ref[...]                                                    # (3, TB) f32

    h1 = jnp.dot(w1_ref[...].astype(jnp.bfloat16),
                 xT.astype(jnp.bfloat16),
                 preferred_element_type=jnp.float32) + b1_ref[...]     # (16, TB)
    h1 = jnp.maximum(h1, 0.0)                                          # ReLU (f32 VPU)

    h2 = jnp.dot(w2_ref[...].astype(jnp.bfloat16),
                 h1.astype(jnp.bfloat16),
                 preferred_element_type=jnp.float32) + b2_ref[...]     # (32, TB)
    h2 = jnp.maximum(h2, 0.0)

    out = jnp.dot(w3_ref[...].astype(jnp.bfloat16),
                  h2.astype(jnp.bfloat16),
                  preferred_element_type=jnp.float32) + b3_ref[...]    # (fc_dim, TB)
    o_ref[...] = out.astype(o_ref.dtype)                               # lane-dense vst


@functools.partial(jax.jit, static_argnames=("tb",))
def latlong_net(x, params, *, tb=2048):
    """x: (B, 3) float32 -> (B, fc_dim) float32.

    tb: batch tile (multiple of 128).  2048 fits comfortably in VMEM on
    v5e/v6e (128 MiB) and v7x (64 MiB): 2 bufs * (TB*3 + TB*fc_dim) * 4B < 2.2 MiB.
    """
    w1, b1, w2, b2, w3, b3 = params
    B = x.shape[0]
    fc_dim = w3.shape[0]

    assert tb % 128 == 0, "tb must be a multiple of 128 (lane width)"
    # Pad batch up to a lane-aligned multiple of the tile; padded columns are
    # computed (cheap, independent) and sliced off afterwards.
    b_lane = pl.cdiv(B, 128) * 128
    TB = min(tb, b_lane)
    B_pad = pl.cdiv(b_lane, TB) * TB

    xT = jnp.transpose(x)                                   # (3, B)   layout plumbing
    if B_pad != B:
        xT = jnp.pad(xT, ((0, 0), (0, B_pad - B)))

    full = lambda a: pl.BlockSpec(a.shape, lambda i: (0,) * a.ndim)

    cost = pl.CostEstimate(
        flops=2 * B_pad * (3 * 16 + 16 * 32 + 32 * fc_dim),
        transcendentals=0,
        bytes_accessed=B_pad * (3 + fc_dim) * 4,
    )

    outT = pl.pallas_call(
        latlong_kernel,
        out_shape=jax.ShapeDtypeStruct((fc_dim, B_pad), jnp.float32),
        grid=(B_pad // TB,),
        in_specs=[
            pl.BlockSpec((3, TB), lambda i: (0, i)),         # x tile, batch on lanes
            full(w1), full(b1),                              # weights/biases: VMEM-resident
            full(w2), full(b2),
            full(w3), full(b3),
        ],
        out_specs=pl.BlockSpec((fc_dim, TB), lambda i: (0, i)),
        compiler_params=pltpu.CompilerParams(
            dimension_semantics=("parallel",),               # shard batch across TCs on v7x
        ),
        cost_estimate=cost,
    )(xT, w1, b1, w2, b2, w3, b3)

    return jnp.transpose(outT[:, :B])                        # (B, fc_dim)


def init_params(key, fc_dim=64):
    """PyTorch nn.Linear-style init, stored in PyTorch's (out, in) layout."""
    dims = [(3, 16), (16, 32), (32, fc_dim)]
    params = []
    for fan_in, fan_out in dims:
        key, kw, kb = jax.random.split(key, 3)
        bound = 1.0 / math.sqrt(fan_in)
        w = jax.random.uniform(kw, (fan_out, fan_in), jnp.float32, -bound, bound)
        b = jax.random.uniform(kb, (fan_out, 1), jnp.float32, -bound, bound)
        params.extend([w, b])
    return tuple(params)


def reference(x, params, bf16_dots=True):
    """Pure-JAX reference: x @ W^T + b per layer, optional bf16-at-matmul."""
    w1, b1, w2, b2, w3, b3 = params

    def mm(a, b):
        if bf16_dots:
            a = a.astype(jnp.bfloat16)
            b = b.astype(jnp.bfloat16)
        return jnp.dot(a, b, preferred_element_type=jnp.float32)

    h = jnp.maximum(mm(x, w1.T) + b1.T, 0.0)
    h = jnp.maximum(mm(h, w2.T) + b2.T, 0.0)
    return mm(h, w3.T) + b3.T


if __name__ == "__main__":
    key = jax.random.PRNGKey(0)
    kx, kx2, kp = jax.random.split(key, 3)

    fc_dim = 64
    params = init_params(kp, fc_dim=fc_dim)

    # Small demo batch.
    B = 8
    x = jax.random.normal(kx, (B, 3), dtype=jnp.float32)
    out = jax.block_until_ready(latlong_net(x, params))
    assert out.shape == (B, fc_dim)
    ref_bf16 = reference(x, params, bf16_dots=True)
    ref_f32 = reference(x, params, bf16_dots=False)
    assert jnp.allclose(out, ref_bf16, atol=1e-3, rtol=1e-3), "mismatch vs bf16 reference"
    assert jnp.allclose(out, ref_f32, atol=5e-2, rtol=5e-2), "mismatch vs f32 reference"

    # Exercise the multi-step grid + batch-padding path (B not a multiple of TB).
    B2 = 300
    x2 = jax.random.normal(kx2, (B2, 3), dtype=jnp.float32)
    out2 = jax.block_until_ready(latlong_net(x2, params, tb=128))
    assert out2.shape == (B2, fc_dim)
    ref2 = reference(x2, params, bf16_dots=True)
    assert jnp.allclose(out2, ref2, atol=1e-3, rtol=1e-3), "mismatch vs reference (tiled)"

    print("KERNEL_OK")
</pallas_src>

<mosaic_0001>
module attributes {stable_mosaic.version = 11 : i64} {
  func.func @latlong_kernel(%arg0: i32, %arg1: memref<3x128xf32, #tpu.memory_space<vmem>>, %arg2: memref<16x3xf32, #tpu.memory_space<vmem>>, %arg3: memref<16x1xf32, #tpu.memory_space<vmem>>, %arg4: memref<32x16xf32, #tpu.memory_space<vmem>>, %arg5: memref<32x1xf32, #tpu.memory_space<vmem>>, %arg6: memref<64x32xf32, #tpu.memory_space<vmem>>, %arg7: memref<64x1xf32, #tpu.memory_space<vmem>>, %arg8: memref<64x128xf32, #tpu.memory_space<vmem>>) attributes {dimension_semantics = [#tpu.dimension_semantics<parallel>], iteration_bounds = array<i64: 1>, scalar_prefetch = 0 : i64, scratch_operands = 0 : i64, tpu.core_type = #tpu.core_type<tc>, window_params = [{transform_indices = @transform_0, window_bounds = array<i64: 3, 128>}, {pipeline_mode = #tpu.pipeline_mode<synchronous>, transform_indices = @transform_1, window_bounds = array<i64: 16, 3>}, {pipeline_mode = #tpu.pipeline_mode<synchronous>, transform_indices = @transform_2, window_bounds = array<i64: 16, 1>}, {pipeline_mode = #tpu.pipeline_mode<synchronous>, transform_indices = @transform_3, window_bounds = array<i64: 32, 16>}, {pipeline_mode = #tpu.pipeline_mode<synchronous>, transform_indices = @transform_4, window_bounds = array<i64: 32, 1>}, {pipeline_mode = #tpu.pipeline_mode<synchronous>, transform_indices = @transform_5, window_bounds = array<i64: 64, 32>}, {pipeline_mode = #tpu.pipeline_mode<synchronous>, transform_indices = @transform_6, window_bounds = array<i64: 64, 1>}, {transform_indices = @transform_7, window_bounds = array<i64: 64, 128>}]} {
    %c0 = arith.constant 0 : index
    %c0_0 = arith.constant 0 : index
    %0 = vector.load %arg1[%c0, %c0_0] : memref<3x128xf32, #tpu.memory_space<vmem>>, vector<3x128xf32>
    %c0_1 = arith.constant 0 : index
    %c0_2 = arith.constant 0 : index
    %1 = vector.load %arg2[%c0_1, %c0_2] : memref<16x3xf32, #tpu.memory_space<vmem>>, vector<16x3xf32>
    %2 = arith.truncf %1 : vector<16x3xf32> to vector<16x3xbf16>
    %3 = arith.truncf %0 : vector<3x128xf32> to vector<3x128xbf16>
    %cst = arith.constant dense<0.000000e+00> : vector<16x128xf32>
    %4 = tpu.matmul %2, %3, %cst {dimension_numbers = #tpu.dot_dimension_numbers<[1], [0], [0], [1], [0, 0, 1, 1], [], []>} : vector<16x3xbf16>, vector<3x128xbf16>, vector<16x128xf32> -> vector<16x128xf32>
    %c0_3 = arith.constant 0 : index
    %c0_4 = arith.constant 0 : index
    %5 = vector.load %arg3[%c0_3, %c0_4] : memref<16x1xf32, #tpu.memory_space<vmem>>, vector<16x1xf32>
    %6 = vector.broadcast %5 : vector<16x1xf32> to vector<16x128xf32>
    %7 = arith.addf %4, %6 : vector<16x128xf32>
    %cst_5 = arith.constant 0.000000e+00 : f32
    %8 = vector.broadcast %cst_5 : f32 to vector<16x128xf32>
    %9 = arith.maximumf %7, %8 : vector<16x128xf32>
    %c0_6 = arith.constant 0 : index
    %c0_7 = arith.constant 0 : index
    %10 = vector.load %arg4[%c0_6, %c0_7] : memref<32x16xf32, #tpu.memory_space<vmem>>, vector<32x16xf32>
    %11 = arith.truncf %10 : vector<32x16xf32> to vector<32x16xbf16>
    %12 = arith.truncf %9 : vector<16x128xf32> to vector<16x128xbf16>
    %cst_8 = arith.constant dense<0.000000e+00> : vector<32x128xf32>
    %13 = tpu.matmul %11, %12, %cst_8 {dimension_numbers = #tpu.dot_dimension_numbers<[1], [0], [0], [1], [0, 0, 1, 1], [], []>} : vector<32x16xbf16>, vector<16x128xbf16>, vector<32x128xf32> -> vector<32x128xf32>
    %c0_9 = arith.constant 0 : index
    %c0_10 = arith.constant 0 : index
    %14 = vector.load %arg5[%c0_9, %c0_10] : memref<32x1xf32, #tpu.memory_space<vmem>>, vector<32x1xf32>
    %15 = vector.broadcast %14 : vector<32x1xf32> to vector<32x128xf32>
    %16 = arith.addf %13, %15 : vector<32x128xf32>
    %cst_11 = arith.constant 0.000000e+00 : f32
    %17 = vector.broadcast %cst_11 : f32 to vector<32x128xf32>
    %18 = arith.maximumf %16, %17 : vector<32x128xf32>
    %c0_12 = arith.constant 0 : index
    %c0_13 = arith.constant 0 : index
    %19 = vector.load %arg6[%c0_12, %c0_13] : memref<64x32xf32, #tpu.memory_space<vmem>>, vector<64x32xf32>
    %20 = arith.truncf %19 : vector<64x32xf32> to vector<64x32xbf16>
    %21 = arith.truncf %18 : vector<32x128xf32> to vector<32x128xbf16>
    %cst_14 = arith.constant dense<0.000000e+00> : vector<64x128xf32>
    %22 = tpu.matmul %20, %21, %cst_14 {dimension_numbers = #tpu.dot_dimension_numbers<[1], [0], [0], [1], [0, 0, 1, 1], [], []>} : vector<64x32xbf16>, vector<32x128xbf16>, vector<64x128xf32> -> vector<64x128xf32>
    %c0_15 = arith.constant 0 : index
    %c0_16 = arith.constant 0 : index
    %23 = vector.load %arg7[%c0_15, %c0_16] : memref<64x1xf32, #tpu.memory_space<vmem>>, vector<64x1xf32>
    %24 = vector.broadcast %23 : vector<64x1xf32> to vector<64x128xf32>
    %25 = arith.addf %22, %24 : vector<64x128xf32>
    %c0_17 = arith.constant 0 : index
    %c0_18 = arith.constant 0 : index
    %26 = vector.load %arg8[%c0_17, %c0_18] : memref<64x128xf32, #tpu.memory_space<vmem>>, vector<64x128xf32>
    tpu.vector_store %arg8[%c0_17, %c0_18], %25 {strides = array<i32>} : memref<64x128xf32, #tpu.memory_space<vmem>>, vector<64x128xf32>,
    return
  }
  func.func @transform_0(%arg0: i32) -> (i32, i32) {
    %c0_i32 = arith.constant 0 : i32
    %c0_i32_0 = arith.constant 0 : i32
    return %c0_i32, %arg0 : i32, i32
  }
  func.func @transform_1(%arg0: i32) -> (i32, i32) {
    %c0_i32 = arith.constant 0 : i32
    %c0_i32_0 = arith.constant 0 : i32
    %c0_i32_1 = arith.constant 0 : i32
    return %c0_i32, %c0_i32_0 : i32, i32
  }
  func.func @transform_2(%arg0: i32) -> (i32, i32) {
    %c0_i32 = arith.constant 0 : i32
    %c0_i32_0 = arith.constant 0 : i32
    %c0_i32_1 = arith.constant 0 : i32
    return %c0_i32, %c0_i32_0 : i32, i32
  }
  func.func @transform_3(%arg0: i32) -> (i32, i32) {
    %c0_i32 = arith.constant 0 : i32
    %c0_i32_0 = arith.constant 0 : i32
    %c0_i32_1 = arith.constant 0 : i32
    return %c0_i32, %c0_i32_0 : i32, i32
  }
  func.func @transform_4(%arg0: i32) -> (i32, i32) {
    %c0_i32 = arith.constant 0 : i32
    %c0_i32_0 = arith.constant 0 : i32
    %c0_i32_1 = arith.constant 0 : i32
    return %c0_i32, %c0_i32_0 : i32, i32
  }
  func.func @transform_5(%arg0: i32) -> (i32, i32) {
    %c0_i32 = arith.constant 0 : i32
    %c0_i32_0 = arith.constant 0 : i32
    %c0_i32_1 = arith.constant 0 : i32
    return %c0_i32, %c0_i32_0 : i32, i32
  }
  func.func @transform_6(%arg0: i32) -> (i32, i32) {
    %c0_i32 = arith.constant 0 : i32
    %c0_i32_0 = arith.constant 0 : i32
    %c0_i32_1 = arith.constant 0 : i32
    return %c0_i32, %c0_i32_0 : i32, i32
  }
  func.func @transform_7(%arg0: i32) -> (i32, i32) {
    %c0_i32 = arith.constant 0 : i32
    %c0_i32_0 = arith.constant 0 : i32
    return %c0_i32, %arg0 : i32, i32
  }
}

</mosaic_0001>

<llo_original>
// kernel: latlong_net.1
$region0: #{latlong_net.1}
  #allocation0 [shape = 'u32[]', space=smem, size = 0x4, offset = 0x4, fixed_abs, tag = 'smem constant byte address 0x4 - core index']
  #allocation1 [shape = 'u32[144,128]{1,0:T(1,128)}', space=vmem, size = 0x12000, scoped, tag = 'internal scratch']
  %s0 = inlined_call_operand.vmem [shape: f32[3,128], index: 0, kind: input, shape index: {}]
  %s1 = inlined_call_operand.vmem [shape: f32[16,3], index: 1, kind: input, shape index: {}]
  %s2 = inlined_call_operand.vmem [shape: f32[16,1], index: 2, kind: input, shape index: {}]
  %s3 = inlined_call_operand.vmem [shape: f32[32,16], index: 3, kind: input, shape index: {}]
  %s4 = inlined_call_operand.vmem [shape: f32[32,1], index: 4, kind: input, shape index: {}]
  %s5 = inlined_call_operand.vmem [shape: f32[64,32], index: 5, kind: input, shape index: {}]
  %s6 = inlined_call_operand.vmem [shape: f32[64,1], index: 6, kind: input, shape index: {}]
  %s7 = inlined_call_operand.vmem [shape: f32[64,128], index: 7, kind: output, shape index: {}]
  %s8 = sld [smem:[#allocation0]]
  $region38: #{latlong_net.1} parent=0
    _
  %s10 = ssub.s32 1, %s8
  %s11 = scalar_select 0, %s10, %s8
  // Predicated region
  $region2: #{latlong_net.1} parent=0 // pred_check
    _
  $region3: #{latlong_net.1} parent=0 // pred_check_branch
    %13 = sbr.rel (0) target = $region5
  $region4: #{latlong_net.1} parent=0 // pred_region
    _
  $region5: #{latlong_net.1} parent=0 // pred_fallthru
    _
  // Predicated region
  $region6: #{latlong_net.1} parent=0 // pred_check
    _
  $region7: #{latlong_net.1} parent=0 // pred_check_branch
    %15 = sbr.rel (0) target = $region9
  $region8: #{latlong_net.1} parent=0 // pred_region
    _
  $region9: #{latlong_net.1} parent=0 // pred_fallthru
    _
  // Predicated region
  $region10: #{latlong_net.1} parent=0 // pred_check
    _
  $region11: #{latlong_net.1} parent=0 // pred_check_branch
    %17 = sbr.rel (0) target = $region13
  $region12: #{latlong_net.1} parent=0 // pred_region
    _
  $region13: #{latlong_net.1} parent=0 // pred_fallthru
    _
  // Predicated region
  $region14: #{latlong_net.1} parent=0 // pred_check
    _
  $region15: #{latlong_net.1} parent=0 // pred_check_branch
    %19 = sbr.rel (0) target = $region17
  $region16: #{latlong_net.1} parent=0 // pred_region
    _
  $region17: #{latlong_net.1} parent=0 // pred_fallthru
    _
  // Predicated region
  $region18: #{latlong_net.1} parent=0 // pred_check
    _
  $region19: #{latlong_net.1} parent=0 // pred_check_branch
    %21 = sbr.rel (0) target = $region21
  $region20: #{latlong_net.1} parent=0 // pred_region
    _
  $region21: #{latlong_net.1} parent=0 // pred_fallthru
    _
  // Predicated region
  $region22: #{latlong_net.1} parent=0 // pred_check
    _
  $region23: #{latlong_net.1} parent=0 // pred_check_branch
    %23 = sbr.rel (0) target = $region25
  $region24: #{latlong_net.1} parent=0 // pred_region
    _
  $region25: #{latlong_net.1} parent=0 // pred_fallthru
    _
  // Predicated region
  $region26: #{latlong_net.1} parent=0 // pred_check
    _
  $region27: #{latlong_net.1} parent=0 // pred_check_branch
    %25 = sbr.rel (0) target = $region29
  $region28: #{latlong_net.1} parent=0 // pred_region
    _
  $region29: #{latlong_net.1} parent=0 // pred_fallthru
    _
  %v27 = vld [vmem:[%s0] sm:$0x7]
  %v28 = vld [vmem:[%s1] sm:$0xff]
  %v29 = vld [vmem:[%s1 + $0x8] sm:$0xff]
  %v30 = vpack.c.bf16 %v29, %v28
  %v31 = vpack.c.bf16 %v27, %v27
  %v32 = vld [vmem:[%s2] sm:$0xff]
  %v33 = vld [vmem:[%s2 + $0x8] sm:$0xff]
  %35 = vset.pattern.permute.xlu0 0
  %36 = vperm.xlu0 %35, %v32
  %v37 = vpop.permute.xlu0 %36
  %40 = vset.pattern.permute.xlu0 0
  %41 = vperm.xlu0 %40, %v33
  %v42 = vpop.permute.xlu0 %41
  %vm44 = vcmask 23552
  %v46 = vsel %vm44, %v30, 0
  %vm48 = vcmask 1040384
  %vm49 = vcmask 1041408
  %v50 = vsel %vm48, 4294967295, 65535
  %v51 = vsel %vm49, %v50, 0
  %v53 = vand.u32 %v31, %v51
  %55 = vmatprep.subr.bf16.mxu0 0
  %56 = vmatpush1.bf16.msra.mxu0 %v53
  %57 = vmatprep.subr.bf16.mxu0 0
  %58 = vmatpush1.bf16.msra.mxu0 0
  %59 = vmatprep.subr.bf16.mxu0 0
  %60 = vmatpush1.bf16.msra.mxu0 0
  %61 = vmatprep.subr.bf16.mxu0 0
  %62 = vmatpush1.bf16.msra.mxu0 0
  %63 = vmatprep.subr.bf16.mxu0 0
  %64 = vmatpush1.bf16.msra.mxu0 0
  %65 = vmatprep.subr.bf16.mxu0 0
  %66 = vmatpush1.bf16.msra.mxu0 0
  %67 = vmatprep.subr.bf16.mxu0 0
  %68 = vmatpush1.bf16.msra.mxu0 0
  %69 = vmatprep.subr.bf16.mxu0 0
  %70 = vmatpush1.bf16.msra.mxu0 0
  %71 = vmatprep.subr.bf16.mxu0 0
  %72 = vmatpush1.bf16.msra.mxu0 0
  %73 = vmatprep.subr.bf16.mxu0 0
  %74 = vmatpush1.bf16.msra.mxu0 0
  %75 = vmatprep.subr.bf16.mxu0 0
  %76 = vmatpush1.bf16.msra.mxu0 0
  %77 = vmatprep.subr.bf16.mxu0 0
  %78 = vmatpush1.bf16.msra.mxu0 0
  %79 = vmatprep.subr.bf16.mxu0 0
  %80 = vmatpush1.bf16.msra.mxu0 0
  %81 = vmatprep.subr.bf16.mxu0 0
  %82 = vmatpush1.bf16.msra.mxu0 0
  %83 = vmatprep.subr.bf16.mxu0 0
  %84 = vmatpush1.bf16.msra.mxu0 0
  %85 = vmatprep.subr.bf16.mxu0 0
  %86 = vmatpush1.bf16.msra.mxu0 0
  %87 = vmatprep.mubr.bf16.mxu0 0
  %88 = vmatmul.mubr.bf16.gmra.mrb[0].mxu0 %v46
  %v89 = vpop.f32.mrb[0].mxu0
  %v90 = vadd.f32 %v37, %v89
  %v91 = vpop.f32.mrb[0].mxu0
  %v92 = vpop.f32.mrb[0].mxu0
  %v93 = vadd.f32 %v42, %v92
  %v94 = vpop.f32.mrb[0].mxu0
  %95 = vdwg.mxu0
  %v96 = vmax.f32 %v90, 0.0
  %v97 = vmax.f32 %v93, 0.0
  %v98 = vld [vmem:[%s3] sm:$0xff]
  %v99 = vld [vmem:[%s3 + $0x8] sm:$0xff]
  %v100 = vld [vmem:[%s3 + $0x10] sm:$0xff]
  %v101 = vld [vmem:[%s3 + $0x18] sm:$0xff]
  %v102 = vpack.c.bf16 %v99, %v98
  %v103 = vpack.c.bf16 %v101, %v100
  %v104 = vpack.c.bf16 %v97, %v96
  %v105 = vld [vmem:[%s4] sm:$0xff]
  %v106 = vld [vmem:[%s4 + $0x8] sm:$0xff]
  %v107 = vld [vmem:[%s4 + $0x10] sm:$0xff]
  %v108 = vld [vmem:[%s4 + $0x18] sm:$0xff]
  %110 = vset.pattern.permute.xlu0 0
  %111 = vperm.xlu0 %110, %v105
  %v112 = vpop.permute.xlu0 %111
  %115 = vset.pattern.permute.xlu0 0
  %116 = vperm.xlu0 %115, %v106
  %v117 = vpop.permute.xlu0 %116
  %120 = vset.pattern.permute.xlu0 0
  %121 = vperm.xlu0 %120, %v107
  %v122 = vpop.permute.xlu0 %121
  %125 = vset.pattern.permute.xlu0 0
  %126 = vperm.xlu0 %125, %v108
  %v127 = vpop.permute.xlu0 %126
  %vm129 = vcmask 130048
  %v131 = vsel %vm129, %v102, 0
  %v134 = vsel %vm129, %v103, 0
  %136 = vmatprep.subr.bf16.mxu0 0
  %137 = vmatpush1.bf16.msra.mxu0 %v104
  %138 = vmatprep.subr.bf16.mxu0 0
  %139 = vmatpush1.bf16.msra.mxu0 0
  %140 = vmatprep.subr.bf16.mxu0 0
  %141 = vmatpush1.bf16.msra.mxu0 0
  %142 = vmatprep.subr.bf16.mxu0 0
  %143 = vmatpush1.bf16.msra.mxu0 0
  %144 = vmatprep.subr.bf16.mxu0 0
  %145 = vmatpush1.bf16.msra.mxu0 0
  %146 = vmatprep.subr.bf16.mxu0 0
  %147 = vmatpush1.bf16.msra.mxu0 0
  %148 = vmatprep.subr.bf16.mxu0 0
  %149 = vmatpush1.bf16.msra.mxu0 0
  %150 = vmatprep.subr.bf16.mxu0 0
  %151 = vmatpush1.bf16.msra.mxu0 0
  %152 = vmatprep.subr.bf16.mxu0 0
  %153 = vmatpush1.bf16.msra.mxu0 0
  %154 = vmatprep.subr.bf16.mxu0 0
  %155 = vmatpush1.bf16.msra.mxu0 0
  %156 = vmatprep.subr.bf16.mxu0 0
  %157 = vmatpush1.bf16.msra.mxu0 0
  %158 = vmatprep.subr.bf16.mxu0 0
  %159 = vmatpush1.bf16.msra.mxu0 0
  %160 = vmatprep.subr.bf16.mxu0 0
  %161 = vmatpush1.bf16.msra.mxu0 0
  %162 = vmatprep.subr.bf16.mxu0 0
  %163 = vmatpush1.bf16.msra.mxu0 0
  %164 = vmatprep.subr.bf16.mxu0 0
  %165 = vmatpush1.bf16.msra.mxu0 0
  %166 = vmatprep.subr.bf16.mxu0 0
  %167 = vmatpush1.bf16.msra.mxu0 0
  %168 = vmatprep.mubr.bf16.mxu0 0
  %169 = vmatmul.mubr.bf16.gmra.mrb[0].mxu0 %v131
  %v170 = vpop.f32.mrb[0].mxu0
  %v171 = vadd.f32 %v112, %v170
  %v172 = vpop.f32.mrb[0].mxu0
  %v173 = vpop.f32.mrb[0].mxu0
  %v174 = vadd.f32 %v117, %v173
  %v175 = vpop.f32.mrb[0].mxu0
  %176 = vmatprep.mubr.bf16.mxu0 0
  %177 = vmatmul.mubr.bf16.gmra.mrb[0].mxu0 %v134
  %v178 = vpop.f32.mrb[0].mxu0
  %v179 = vadd.f32 %v122, %v178
  %v180 = vpop.f32.mrb[0].mxu0
  %v181 = vpop.f32.mrb[0].mxu0
  %v182 = vadd.f32 %v127, %v181
  %v183 = vpop.f32.mrb[0].mxu0
  %184 = vdwg.mxu0
  %v185 = vmax.f32 %v171, 0.0
  %v186 = vmax.f32 %v174, 0.0
  %v187 = vmax.f32 %v179, 0.0
  %v188 = vmax.f32 %v182, 0.0
  %v189 = vld [vmem:[%s5] sm:$0xff]
  %v190 = vld [vmem:[%s5 + $0x8] sm:$0xff]
  %v191 = vld [vmem:[%s5 + $0x10] sm:$0xff]
  %v192 = vld [vmem:[%s5 + $0x18] sm:$0xff]
  %v193 = vld [vmem:[%s5 + $0x20] sm:$0xff]
  %v194 = vld [vmem:[%s5 + $0x28] sm:$0xff]
  %v195 = vld [vmem:[%s5 + $0x30] sm:$0xff]
  %v196 = vld [vmem:[%s5 + $0x38] sm:$0xff]
  %v197 = vpack.c.bf16 %v190, %v189
  %v198 = vpack.c.bf16 %v192, %v191
  %v199 = vpack.c.bf16 %v194, %v193
  %v200 = vpack.c.bf16 %v196, %v195
  %v201 = vpack.c.bf16 %v186, %v185
  %v202 = vpack.c.bf16 %v188, %v187
  %v203 = vld [vmem:[%s6] sm:$0xff]
  %v204 = vld [vmem:[%s6 + $0x8] sm:$0xff]
  %v205 = vld [vmem:[%s6 + $0x10] sm:$0xff]
  %v206 = vld [vmem:[%s6 + $0x18] sm:$0xff]
  %v207 = vld [vmem:[%s6 + $0x20] sm:$0xff]
  %v208 = vld [vmem:[%s6 + $0x28] sm:$0xff]
  %v209 = vld [vmem:[%s6 + $0x30] sm:$0xff]
  %v210 = vld [vmem:[%s6 + $0x38] sm:$0xff]
  %212 = vset.pattern.permute.xlu0 0
  %213 = vperm.xlu0 %212, %v203
  %v214 = vpop.permute.xlu0 %213
  %217 = vset.pattern.permute.xlu0 0
  %218 = vperm.xlu0 %217, %v204
  %v219 = vpop.permute.xlu0 %218
  %222 = vset.pattern.permute.xlu0 0
  %223 = vperm.xlu0 %222, %v205
  %v224 = vpop.permute.xlu0 %223
  %227 = vset.pattern.permute.xlu0 0
  %228 = vperm.xlu0 %227, %v206
  %v229 = vpop.permute.xlu0 %228
  %232 = vset.pattern.permute.xlu0 0
  %233 = vperm.xlu0 %232, %v207
  %v234 = vpop.permute.xlu0 %233
  %237 = vset.pattern.permute.xlu0 0
  %238 = vperm.xlu0 %237, %v208
  %v239 = vpop.permute.xlu0 %238
  %242 = vset.pattern.permute.xlu0 0
  %243 = vperm.xlu0 %242, %v209
  %v244 = vpop.permute.xlu0 %243
  %247 = vset.pattern.permute.xlu0 0
  %248 = vperm.xlu0 %247, %v210
  %v249 = vpop.permute.xlu0 %248
  %vm251 = vcmask 261120
  %v253 = vsel %vm251, %v197, 0
  %v256 = vsel %vm251, %v198, 0
  %v259 = vsel %vm251, %v199, 0
  %v262 = vsel %vm251, %v200, 0
  %264 = vmatprep.subr.bf16.mxu0 0
  %265 = vmatpush1.bf16.msra.mxu0 %v201
  %266 = vmatprep.subr.bf16.mxu0 0
  %267 = vmatpush1.bf16.msra.mxu0 %v202
  %268 = vmatprep.subr.bf16.mxu0 0
  %269 = vmatpush1.bf16.msra.mxu0 0
  %270 = vmatprep.subr.bf16.mxu0 0
  %271 = vmatpush1.bf16.msra.mxu0 0
  %272 = vmatprep.subr.bf16.mxu0 0
  %273 = vmatpush1.bf16.msra.mxu0 0
  %274 = vmatprep.subr.bf16.mxu0 0
  %275 = vmatpush1.bf16.msra.mxu0 0
  %276 = vmatprep.subr.bf16.mxu0 0
  %277 = vmatpush1.bf16.msra.mxu0 0
  %278 = vmatprep.subr.bf16.mxu0 0
  %279 = vmatpush1.bf16.msra.mxu0 0
  %280 = vmatprep.subr.bf16.mxu0 0
  %281 = vmatpush1.bf16.msra.mxu0 0
  %282 = vmatprep.subr.bf16.mxu0 0
  %283 = vmatpush1.bf16.msra.mxu0 0
  %284 = vmatprep.subr.bf16.mxu0 0
  %285 = vmatpush1.bf16.msra.mxu0 0
  %286 = vmatprep.subr.bf16.mxu0 0
  %287 = vmatpush1.bf16.msra.mxu0 0
  %288 = vmatprep.subr.bf16.mxu0 0
  %289 = vmatpush1.bf16.msra.mxu0 0
  %290 = vmatprep.subr.bf16.mxu0 0
  %291 = vmatpush1.bf16.msra.mxu0 0
  %292 = vmatprep.subr.bf16.mxu0 0
  %293 = vmatpush1.bf16.msra.mxu0 0
  %294 = vmatprep.subr.bf16.mxu0 0
  %295 = vmatpush1.bf16.msra.mxu0 0
  %296 = vmatprep.mubr.bf16.mxu0 0
  %297 = vmatmul.mubr.bf16.gmra.mrb[0].mxu0 %v253
  %v298 = vpop.f32.mrb[0].mxu0
  %v299 = vadd.f32 %v214, %v298
  %v300 = vpop.f32.mrb[0].mxu0
  %v301 = vpop.f32.mrb[0].mxu0
  %v302 = vadd.f32 %v219, %v301
  %v303 = vpop.f32.mrb[0].mxu0
  %304 = vmatprep.mubr.bf16.mxu0 0
  %305 = vmatmul.mubr.bf16.gmra.mrb[0].mxu0 %v256
  %v306 = vpop.f32.mrb[0].mxu0
  %v307 = vadd.f32 %v224, %v306
  %v308 = vpop.f32.mrb[0].mxu0
  %v309 = vpop.f32.mrb[0].mxu0
  %v310 = vadd.f32 %v229, %v309
  %v311 = vpop.f32.mrb[0].mxu0
  %312 = vmatprep.mubr.bf16.mxu0 0
  %313 = vmatmul.mubr.bf16.gmra.mrb[0].mxu0 %v259
  %v314 = vpop.f32.mrb[0].mxu0
  %v315 = vadd.f32 %v234, %v314
  %v316 = vpop.f32.mrb[0].mxu0
  %v317 = vpop.f32.mrb[0].mxu0
  %v318 = vadd.f32 %v239, %v317
  %v319 = vpop.f32.mrb[0].mxu0
  %320 = vmatprep.mubr.bf16.mxu0 0
  %321 = vmatmul.mubr.bf16.gmra.mrb[0].mxu0 %v262
  %v322 = vpop.f32.mrb[0].mxu0
  %v323 = vadd.f32 %v244, %v322
  %v324 = vpop.f32.mrb[0].mxu0
  %v325 = vpop.f32.mrb[0].mxu0
  %v326 = vadd.f32 %v249, %v325
  %v327 = vpop.f32.mrb[0].mxu0
  %328 = vdwg.mxu0
  %329 = vst [vmem:[%s7] sm:$0xff] %v299
  %330 = vst [vmem:[%s7 + $0x8] sm:$0xff] %v302
  %331 = vst [vmem:[%s7 + $0x10] sm:$0xff] %v307
  %332 = vst [vmem:[%s7 + $0x18] sm:$0xff] %v310
  %333 = vst [vmem:[%s7 + $0x20] sm:$0xff] %v315
  %334 = vst [vmem:[%s7 + $0x28] sm:$0xff] %v318
  %335 = vst [vmem:[%s7 + $0x30] sm:$0xff] %v323
  %336 = vst [vmem:[%s7 + $0x38] sm:$0xff] %v326
  // Predicated region
  $region30: #{latlong_net.1} parent=0 // pred_check
    _
  $region31: #{latlong_net.1} parent=0 // pred_check_branch
    %338 = sbr.rel (0) target = $region33
  $region32: #{latlong_net.1} parent=0 // pred_region
    _
  $region33: #{latlong_net.1} parent=0 // pred_fallthru
    _
  // Predicated region
  $region34: #{latlong_net.1} parent=0 // pred_check
    _
  $region35: #{latlong_net.1} parent=0 // pred_check_branch
    %340 = sbr.rel (0) target = $region37
  $region36: #{latlong_net.1} parent=0 // pred_region
    _
  $region37: #{latlong_net.1} parent=0 // pred_fallthru
    _

</llo_original>
